<compile_context>
chip_gen: v7x
topology: tpu7x:2x2x1
jax: 0.10.0
libtpu: 0.0.40
codegen_flags: <defaults>
</compile_context>

<pallas_src>
import functools

import jax
import jax.numpy as jnp
from jax.experimental import pallas as pl
from jax.experimental.pallas import tpu as pltpu

SUBLANE = 8
LANE = 128
TM_CAP = 1024  # max packed-rows per tile


def _round_up(x, m):
    return ((x + m - 1) // m) * m


# ----------------------------------------------------------------------------
# Kernel: one fused GEMM + bias add on the packed layout.
# ----------------------------------------------------------------------------
def aligner_kernel(x_ref, w_ref, b_ref, o_ref):
    o_ref[...] = (
        jnp.dot(x_ref[...], w_ref[...], preferred_element_type=jnp.float32)
        + b_ref[...]
    ).astype(o_ref.dtype)


# ----------------------------------------------------------------------------
# One-time parameter preparation (hoisted out of the per-call forward).
# ----------------------------------------------------------------------------
def _choose_pack(n):
    # Pack `pack` logical rows into one 128-lane row when N divides 128.
    if n < LANE and LANE % n == 0:
        return LANE // n
    return 1


def prepare_aligner_params(w1, b1, w2, b2, w3, b3):
    """Collapse the 3 linears and build the packed block-diagonal weight/bias.

    Returns (w_packed (Kp, Kp), b_packed (1, Kp), n, pack).  Call ONCE.
    """
    f32 = jnp.float32
    w1t = jnp.asarray(w1, f32).T          # (N, N)     in -> out layout
    w2t = jnp.asarray(w2, f32).T          # (N, N//2)
    w3t = jnp.asarray(w3, f32).T          # (N//2, N)
    w_comb = (w1t @ w2t) @ w3t            # (N, N)
    b_comb = (jnp.asarray(b1, f32).reshape(1, -1) @ w2t @ w3t
              + jnp.asarray(b2, f32).reshape(1, -1) @ w3t
              + jnp.asarray(b3, f32).reshape(1, -1))          # (1, N)

    n = w_comb.shape[0]
    pack = _choose_pack(n)
    k_raw = pack * n
    kp = _round_up(k_raw, LANE)

    # Block-diagonal weight: kron(I_pack, W_comb); tiled bias.
    w_blk = jnp.kron(jnp.eye(pack, dtype=f32), w_comb)        # (k_raw, k_raw)
    b_blk = jnp.tile(b_comb, (1, pack))                        # (1, k_raw)

    if kp != k_raw:  # generic-N fallback: lane-pad to a multiple of 128
        w_blk = jnp.zeros((kp, kp), f32).at[:k_raw, :k_raw].set(w_blk)
        b_blk = jnp.zeros((1, kp), f32).at[:, :k_raw].set(b_blk)

    return jax.device_put(w_blk), jax.device_put(b_blk), n, pack


# ----------------------------------------------------------------------------
# Forward pass (per-call): pack rows, one pallas_call, unpack.
# ----------------------------------------------------------------------------
@functools.partial(jax.jit, static_argnames=("n", "pack"))
def _aligner_forward_packed(x, w_packed, b_packed, *, n, pack):
    orig_dtype = x.dtype
    B = x.shape[0]
    kp = w_packed.shape[0]
    k_raw = pack * n
    f32 = jnp.float32

    # Pad batch to a multiple of the pack factor, then pack rows into lanes.
    bpk = _round_up(B, pack)
    xf = x.astype(f32)
    if bpk != B:
        xf = jnp.pad(xf, ((0, bpk - B), (0, 0)))
    xp = xf.reshape(bpk // pack, k_raw)
    if kp != k_raw:  # generic-N fallback path only
        xp = jnp.pad(xp, ((0, 0), (0, kp - k_raw)))
    rows = bpk // pack

    # Adaptive batch tiling.
    if rows <= 16:
        # Tiny: single full-array block (block_shape == array dims, no padding).
        tm = rows
        rows_p = rows
    else:
        # >=2 grid steps (lets v7x's 2 TensorCores split the parallel axis),
        # tile rounded to 8 sublanes, capped at TM_CAP, small tail waste.
        g = max(2, pl.cdiv(rows, TM_CAP))
        tm = _round_up(pl.cdiv(rows, g), SUBLANE)
        rows_p = pl.cdiv(rows, tm) * tm
    if rows_p != rows:
        xp = jnp.pad(xp, ((0, rows_p - rows), (0, 0)))

    cost = pl.CostEstimate(
        flops=2 * rows_p * kp * kp,
        transcendentals=0,
        bytes_accessed=(2 * rows_p * kp + kp * kp + kp) * 4,
    )

    out = pl.pallas_call(
        aligner_kernel,
        out_shape=jax.ShapeDtypeStruct((rows_p, kp), orig_dtype),
        grid=(rows_p // tm,),
        in_specs=[
            pl.BlockSpec((tm, kp), lambda i: (i, 0)),   # packed activations
            pl.BlockSpec((kp, kp), lambda i: (0, 0)),   # weight: VMEM-resident
            pl.BlockSpec((1, kp), lambda i: (0, 0)),    # bias:   VMEM-resident
        ],
        out_specs=pl.BlockSpec((tm, kp), lambda i: (i, 0)),
        compiler_params=pltpu.CompilerParams(
            dimension_semantics=("parallel",),
        ),
        cost_estimate=cost,
    )(xp, w_packed, b_packed)

    # Unpack: drop tile padding, drop lane padding, un-concatenate rows,
    # drop pack padding.
    out = out[:rows, :k_raw].reshape(bpk, n)[:B]
    return out.astype(orig_dtype)


def aligner_forward(x, params):
    w_packed, b_packed, n, pack = params
    return _aligner_forward_packed(x, w_packed, b_packed, n=n, pack=pack)


# ----------------------------------------------------------------------------
# Reference / init helpers.
# ----------------------------------------------------------------------------
def init_linear(key, fan_in, fan_out):
    # Mimics torch.nn.Linear default init (uniform +/- 1/sqrt(fan_in)).
    kw, kb = jax.random.split(key)
    bound = 1.0 / (fan_in ** 0.5)
    w = jax.random.uniform(kw, (fan_out, fan_in), jnp.float32, -bound, bound)
    b = jax.random.uniform(kb, (1, fan_out), jnp.float32, -bound, bound)
    return w, b


def reference_forward(x, w1, b1, w2, b2, w3, b3):
    # Literal transcription of the PyTorch module (3 separate Linear layers).
    h = x @ w1.T + b1
    h = h @ w2.T + b2
    h = h @ w3.T + b3
    return h


if __name__ == "__main__":
    N_SOURCE_NODES = 32   # layer1: N->N, layer2: N->N//2, layer3: N//2->N

    key = jax.random.PRNGKey(0)
    kx, kx2, k1, k2, k3 = jax.random.split(key, 5)

    w1, b1 = init_linear(k1, N_SOURCE_NODES, N_SOURCE_NODES)
    w2, b2 = init_linear(k2, N_SOURCE_NODES, N_SOURCE_NODES // 2)
    w3, b3 = init_linear(k3, N_SOURCE_NODES // 2, N_SOURCE_NODES)

    # One-time collapse + packing (hoisted out of the forward pass).
    params = prepare_aligner_params(w1, b1, w2, b2, w3, b3)

    # Production-like tiny batch (single full-array block path).
    data_small = jax.random.normal(kx, (8, N_SOURCE_NODES), jnp.float32)
    out_small = jax.block_until_ready(aligner_forward(data_small, params))
    ref_small = reference_forward(data_small, w1, b1, w2, b2, w3, b3)
    assert out_small.shape == (8, N_SOURCE_NODES)
    assert jnp.allclose(out_small, ref_small, atol=1e-4, rtol=1e-4), float(
        jnp.max(jnp.abs(out_small - ref_small)))

    # Larger batch exercising pack-padding + multi-step parallel grid.
    data_big = jax.random.normal(kx2, (530, N_SOURCE_NODES), jnp.float32)
    out_big = jax.block_until_ready(aligner_forward(data_big, params))
    ref_big = reference_forward(data_big, w1, b1, w2, b2, w3, b3)
    assert out_big.shape == (530, N_SOURCE_NODES)
    assert jnp.allclose(out_big, ref_big, atol=1e-4, rtol=1e-4), float(
        jnp.max(jnp.abs(out_big - ref_big)))

    print("KERNEL_OK")
</pallas_src>

<mosaic_0001>
module attributes {stable_mosaic.version = 11 : i64} {
  func.func @aligner_kernel(%arg0: i32, %arg1: memref<2x128xf32, #tpu.memory_space<vmem>>, %arg2: memref<128x128xf32, #tpu.memory_space<vmem>>, %arg3: memref<1x128xf32, #tpu.memory_space<vmem>>, %arg4: memref<2x128xf32, #tpu.memory_space<vmem>>) attributes {dimension_semantics = [#tpu.dimension_semantics<parallel>], iteration_bounds = array<i64: 1>, scalar_prefetch = 0 : i64, scratch_operands = 0 : i64, tpu.core_type = #tpu.core_type<tc>, window_params = [{transform_indices = @transform_0, window_bounds = array<i64: 2, 128>}, {pipeline_mode = #tpu.pipeline_mode<synchronous>, transform_indices = @transform_1, window_bounds = array<i64: 128, 128>}, {pipeline_mode = #tpu.pipeline_mode<synchronous>, transform_indices = @transform_2, window_bounds = array<i64: 1, 128>}, {transform_indices = @transform_3, window_bounds = array<i64: 2, 128>}]} {
    %c0 = arith.constant 0 : index
    %c0_0 = arith.constant 0 : index
    %0 = vector.load %arg1[%c0, %c0_0] : memref<2x128xf32, #tpu.memory_space<vmem>>, vector<2x128xf32>
    %c0_1 = arith.constant 0 : index
    %c0_2 = arith.constant 0 : index
    %1 = vector.load %arg2[%c0_1, %c0_2] : memref<128x128xf32, #tpu.memory_space<vmem>>, vector<128x128xf32>
    %cst = arith.constant dense<0.000000e+00> : vector<2x128xf32>
    %2 = tpu.matmul %0, %1, %cst {dimension_numbers = #tpu.dot_dimension_numbers<[1], [0], [0], [1], [0, 0, 1, 1], [], []>} : vector<2x128xf32>, vector<128x128xf32>, vector<2x128xf32> -> vector<2x128xf32>
    %c0_3 = arith.constant 0 : index
    %c0_4 = arith.constant 0 : index
    %3 = vector.load %arg3[%c0_3, %c0_4] : memref<1x128xf32, #tpu.memory_space<vmem>>, vector<1x128xf32>
    %4 = vector.broadcast %3 : vector<1x128xf32> to vector<2x128xf32>
    %5 = arith.addf %2, %4 : vector<2x128xf32>
    %c0_5 = arith.constant 0 : index
    %c0_6 = arith.constant 0 : index
    %6 = vector.load %arg4[%c0_5, %c0_6] : memref<2x128xf32, #tpu.memory_space<vmem>>, vector<2x128xf32>
    tpu.vector_store %arg4[%c0_5, %c0_6], %5 {strides = array<i32>} : memref<2x128xf32, #tpu.memory_space<vmem>>, vector<2x128xf32>,
    return
  }
  func.func @transform_0(%arg0: i32) -> (i32, i32) {
    %c0_i32 = arith.constant 0 : i32
    %c0_i32_0 = arith.constant 0 : i32
    return %arg0, %c0_i32 : i32, i32
  }
  func.func @transform_1(%arg0: i32) -> (i32, i32) {
    %c0_i32 = arith.constant 0 : i32
    %c0_i32_0 = arith.constant 0 : i32
    %c0_i32_1 = arith.constant 0 : i32
    return %c0_i32, %c0_i32_0 : i32, i32
  }
  func.func @transform_2(%arg0: i32) -> (i32, i32) {
    %c0_i32 = arith.constant 0 : i32
    %c0_i32_0 = arith.constant 0 : i32
    %c0_i32_1 = arith.constant 0 : i32
    return %c0_i32, %c0_i32_0 : i32, i32
  }
  func.func @transform_3(%arg0: i32) -> (i32, i32) {
    %c0_i32 = arith.constant 0 : i32
    %c0_i32_0 = arith.constant 0 : i32
    return %arg0, %c0_i32 : i32, i32
  }
}

</mosaic_0001>

<llo_original>
// kernel: _aligner_forward_packed.1
$region0: #{_aligner_forward_packed.1}
  #allocation0 [shape = 'u32[]', space=smem, size = 0x4, offset = 0x4, fixed_abs, tag = 'smem constant byte address 0x4 - core index']
  #allocation1 [shape = 'u32[144,128]{1,0:T(1,128)}', space=vmem, size = 0x12000, scoped, tag = 'internal scratch']
  %s0 = inlined_call_operand.vmem [shape: f32[2,128], index: 0, kind: input, shape index: {}]
  %s1 = inlined_call_operand.hbm [shape: f32[128,128], index: 1, kind: input, shape index: {}]
  %s2 = inlined_call_operand.vmem [shape: f32[1,128], index: 2, kind: input, shape index: {}]
  %s3 = inlined_call_operand.vmem [shape: f32[2,128], index: 3, kind: output, shape index: {}]
  %s4 = sld [smem:[#allocation0]]
  $region26: #{_aligner_forward_packed.1} parent=0
    _
  %s6 = ssub.s32 1, %s4
  %s7 = scalar_select 0, %s6, %s4
  $region1: #{_aligner_forward_packed.1} parent=0
    #allocation2 [shape = 'u8[65536]{0}', space=vmem, size = 0x10000, scoped, tag = 'input window, operand 1, single buffered']
    #allocation3 [shape = 's32[1]{0}', space=sflag, size = 0x4, scoped, tag = 'scoped memory for _aligner_forward_packed.1']
    %8 = vsyncpa [#allocation3], 0
    // Predicated region
    $region2: #{_aligner_forward_packed.1} parent=1 // pred_check
      _
    $region3: #{_aligner_forward_packed.1} parent=1 // pred_check_branch
      %10 = sbr.rel (0) target = $region5
    $region4: #{_aligner_forward_packed.1} parent=1 // pred_region
      _
    $region5: #{_aligner_forward_packed.1} parent=1 // pred_fallthru
      _
    // Predicated region
    $region6: #{_aligner_forward_packed.1} parent=1 // pred_check
      _
    $region7: #{_aligner_forward_packed.1} parent=1 // pred_check_branch
      %12 = sbr.rel (0) target = $region9
    $region8: #{_aligner_forward_packed.1} parent=1 // pred_region
      %s14 = ssub.s32 2048, 2048
      %15 = vsyncadd [#allocation3], %s14
      %s16 = sshll.u32 [#allocation2], 4
      %s17 = int_to_ptr.vmem [resolvable:$true] %s16
      %22 = dma.hbm_to_vmem [thread:$0]  %s1, 2048, %s17, [#allocation3], 128, 128, 8
    $region9: #{_aligner_forward_packed.1} parent=1 // pred_fallthru
      _
    // Predicated region
    $region10: #{_aligner_forward_packed.1} parent=1 // pred_check
      _
    $region11: #{_aligner_forward_packed.1} parent=1 // pred_check_branch
      %24 = sbr.rel (0) target = $region13
    $region12: #{_aligner_forward_packed.1} parent=1 // pred_region
      _
    $region13: #{_aligner_forward_packed.1} parent=1 // pred_fallthru
      _
    // Predicated region
    $region14: #{_aligner_forward_packed.1} parent=1 // pred_check
      _
    $region15: #{_aligner_forward_packed.1} parent=1 // pred_check_branch
      %26 = sbr.rel (0) target = $region17
    $region16: #{_aligner_forward_packed.1} parent=1 // pred_region
      %27 = dma.done [#allocation3], 2048
    $region17: #{_aligner_forward_packed.1} parent=1 // pred_fallthru
      _
    %v28 = vld [vmem:[%s0] sm:$0x3]
    %v29 = vld [vmem:[#allocation2] sm:$0xff]
    %v30 = vld [vmem:[#allocation2 + $0x8] sm:$0xff]
    %v31 = vld [vmem:[#allocation2 + $0x10] sm:$0xff]
    %v32 = vld [vmem:[#allocation2 + $0x18] sm:$0xff]
    %v33 = vld [vmem:[#allocation2 + $0x20] sm:$0xff]
    %v34 = vld [vmem:[#allocation2 + $0x28] sm:$0xff]
    %v35 = vld [vmem:[#allocation2 + $0x30] sm:$0xff]
    %v36 = vld [vmem:[#allocation2 + $0x38] sm:$0xff]
    %v37 = vld [vmem:[#allocation2 + $0x40] sm:$0xff]
    %v38 = vld [vmem:[#allocation2 + $0x48] sm:$0xff]
    %v39 = vld [vmem:[#allocation2 + $0x50] sm:$0xff]
    %v40 = vld [vmem:[#allocation2 + $0x58] sm:$0xff]
    %v41 = vld [vmem:[#allocation2 + $0x60] sm:$0xff]
    %v42 = vld [vmem:[#allocation2 + $0x68] sm:$0xff]
    %v43 = vld [vmem:[#allocation2 + $0x70] sm:$0xff]
    %v44 = vld [vmem:[#allocation2 + $0x78] sm:$0xff]
    %v45 = vld [vmem:[%s2] sm:$0x1]
    %v47 = vlaneseq
    %v48 = vshrl.u32 %v47, 7
    %v49 = vsub.s32 0, %v48
    %v50 = vrot.slane %v45, %v49
    %52 = vmatprep.subr.mxu0 0.0
    %53 = vmatpush1.msra.mxu0 %v29
    %54 = vmatprep.subr.mxu0 0.0
    %55 = vmatpush1.msra.mxu0 %v30
    %56 = vmatprep.subr.mxu0 0.0
    %57 = vmatpush1.msra.mxu0 %v31
    %58 = vmatprep.subr.mxu0 0.0
    %59 = vmatpush1.msra.mxu0 %v32
    %60 = vmatprep.subr.mxu0 0.0
    %61 = vmatpush1.msra.mxu0 %v33
    %62 = vmatprep.subr.mxu0 0.0
    %63 = vmatpush1.msra.mxu0 %v34
    %64 = vmatprep.subr.mxu0 0.0
    %65 = vmatpush1.msra.mxu0 %v35
    %66 = vmatprep.subr.mxu0 0.0
    %67 = vmatpush1.msra.mxu0 %v36
    %68 = vmatprep.subr.mxu0 0.0
    %69 = vmatpush1.msra.mxu0 %v37
    %70 = vmatprep.subr.mxu0 0.0
    %71 = vmatpush1.msra.mxu0 %v38
    %72 = vmatprep.subr.mxu0 0.0
    %73 = vmatpush1.msra.mxu0 %v39
    %74 = vmatprep.subr.mxu0 0.0
    %75 = vmatpush1.msra.mxu0 %v40
    %76 = vmatprep.subr.mxu0 0.0
    %77 = vmatpush1.msra.mxu0 %v41
    %78 = vmatprep.subr.mxu0 0.0
    %79 = vmatpush1.msra.mxu0 %v42
    %80 = vmatprep.subr.mxu0 0.0
    %81 = vmatpush1.msra.mxu0 %v43
    %82 = vmatprep.subr.mxu0 0.0
    %83 = vmatpush1.msra.mxu0 %v44
    %84 = vmatprep.subr.mxu0 0.0
    %85 = vmatpush1.msra.mxu0 0.0
    %86 = vmatprep.subr.mxu0 0.0
    %87 = vmatpush1.msra.mxu0 0.0
    %88 = vmatprep.subr.mxu0 0.0
    %89 = vmatpush1.msra.mxu0 0.0
    %90 = vmatprep.subr.mxu0 0.0
    %91 = vmatpush1.msra.mxu0 0.0
    %92 = vmatprep.subr.mxu0 0.0
    %93 = vmatpush1.msra.mxu0 0.0
    %94 = vmatprep.subr.mxu0 0.0
    %95 = vmatpush1.msra.mxu0 0.0
    %96 = vmatprep.subr.mxu0 0.0
    %97 = vmatpush1.msra.mxu0 0.0
    %98 = vmatprep.subr.mxu0 0.0
    %99 = vmatpush1.msra.mxu0 0.0
    %100 = vmatprep.subr.mxu0 0.0
    %101 = vmatpush1.msra.mxu0 0.0
    %102 = vmatprep.subr.mxu0 0.0
    %103 = vmatpush1.msra.mxu0 0.0
    %104 = vmatprep.subr.mxu0 0.0
    %105 = vmatpush1.msra.mxu0 0.0
    %106 = vmatprep.subr.mxu0 0.0
    %107 = vmatpush1.msra.mxu0 0.0
    %108 = vmatprep.subr.mxu0 0.0
    %109 = vmatpush1.msra.mxu0 0.0
    %110 = vmatprep.subr.mxu0 0.0
    %111 = vmatpush1.msra.mxu0 0.0
    %112 = vmatprep.subr.mxu0 0.0
    %113 = vmatpush1.msra.mxu0 0.0
    %114 = vmatprep.subr.mxu0 0.0
    %115 = vmatpush1.msra.mxu0 0.0
    %116 = vmatprep.mubr.f32.mxu0 0.0
    %117 = vmatmul.mubr.f32.gmra.mrb[0].mxu0 %v28
    %v118 = vpop.f32.mrb[0].mxu0
    %v119 = vadd.f32 %v50, %v118
    %v120 = vpop.f32.mrb[0].mxu0
    %121 = vdwg.mxu0
    %122 = vst [vmem:[%s3] sm:$0x3] %v119
    // Predicated region
    $region18: #{_aligner_forward_packed.1} parent=1 // pred_check
      _
    $region19: #{_aligner_forward_packed.1} parent=1 // pred_check_branch
      %124 = sbr.rel (0) target = $region21
    $region20: #{_aligner_forward_packed.1} parent=1 // pred_region
      _
    $region21: #{_aligner_forward_packed.1} parent=1 // pred_fallthru
      _
    // Predicated region
    $region22: #{_aligner_forward_packed.1} parent=1 // pred_check
      _
    $region23: #{_aligner_forward_packed.1} parent=1 // pred_check_branch
      %126 = sbr.rel (0) target = $region25
    $region24: #{_aligner_forward_packed.1} parent=1 // pred_region
      _
    $region25: #{_aligner_forward_packed.1} parent=1 // pred_fallthru
      _
    %127 = vsyncpa [#allocation3], 1

</llo_original>
